<compile_context>
chip_gen: v7x
topology: tpu7x:2x2x1
jax: 0.10.0
libtpu: 0.0.40
codegen_flags: <defaults>
</compile_context>

<pallas_src>
import jax
import jax.numpy as jnp
from jax.experimental import pallas as pl
from jax.experimental.pallas import tpu as pltpu


# ----------------------------- kernel ---------------------------------------

def _mclassifier_fused_kernel(f0_ref, f1_ref, f2_ref, f3_ref, f4_ref,
                              eps_ref, w_ref, b_ref, o_ref):
    # --- VAE reparameterization for head 3 (i == 3 branch of the torch forward) ---
    # Algebraically identical to the torch 5-sample loop:
    #   sum_k(eps_k * (std*0.001) + mean) / 5  ==  mean + (std*0.001) * mean_k(eps_k)
    mean = f3_ref[:, :256]
    logvar = f3_ref[:, 256:]
    std = jnp.exp(0.5 * logvar)                       # EUP (free slot)
    feat3 = mean + (std * 0.001) * eps_ref[...]       # single f32 VPU FMA pass

    # --- one lane-dense concatenated feature row [B, 128+256+384+256+640] ---
    # (every piece is a multiple of 128 lanes -> pure vreg copies, no cross-lane work)
    x = jnp.concatenate(
        [f0_ref[...], f1_ref[...], f2_ref[...], feat3, f4_ref[...]], axis=-1)

    # --- one block-diagonal MXU matmul + bias, one unmasked [B, 128] store ---
    o_ref[...] = (
        jnp.dot(x, w_ref[...], preferred_element_type=jnp.float32) + b_ref[...]
    ).astype(o_ref.dtype)


# ----------------------------- wrappers -------------------------------------

def build_fused_params(params, num_classes, lane_pad=128):
    """Precompute (at init time) the block-diagonal weight and concatenated bias.

    params: list of (w_i [in_i, C], b_i [1, C]).
    Returns W_bd [sum(in_i), N_pad], b_cat [1, N_pad] with N_pad a multiple of 128.
    """
    in_dims = [w.shape[0] for w, _ in params]
    k_total = sum(in_dims)
    n_real = len(params) * num_classes
    n_pad = ((n_real + lane_pad - 1) // lane_pad) * lane_pad

    w_bd = jnp.zeros((k_total, n_pad), jnp.float32)
    b_cat = jnp.zeros((1, n_pad), jnp.float32)
    row = 0
    for i, (w, b) in enumerate(params):
        col = i * num_classes
        w_bd = w_bd.at[row:row + w.shape[0], col:col + num_classes].set(w)
        b_cat = b_cat.at[:, col:col + num_classes].set(b.reshape(1, num_classes))
        row += w.shape[0]
    return w_bd, b_cat


def mclassifier_forward(feats, fused_w, fused_b, eps, num_classes):
    """feats: list of 5 [B, d_i] arrays (feats[3] is 256 mean || 256 log-var).
    fused_w/fused_b: from build_fused_params. eps: (5, B, 256) N(0,1) draws."""
    assert len(feats) == 5
    B = feats[0].shape[0]
    n_pad = fused_w.shape[1]

    # Reduce eps to its mean once in the wrapper -> 5x less eps DMA into the kernel.
    eps_mean = jnp.mean(eps, axis=0)                  # (B, 256)

    vmem_specs = [pl.BlockSpec(memory_space=pltpu.MemorySpace.VMEM) for _ in range(8)]
    slab = pl.pallas_call(
        _mclassifier_fused_kernel,
        out_shape=jax.ShapeDtypeStruct((B, n_pad), jnp.float32),
        in_specs=vmem_specs,
        out_specs=pl.BlockSpec(memory_space=pltpu.MemorySpace.VMEM),
    )(*feats, eps_mean, fused_w, fused_b)

    # Slice the lane-dense slab back into per-head logits.
    return [slab[:, i * num_classes:(i + 1) * num_classes] for i in range(len(feats))]


# pure-JAX reference matching the torch forward (explicit 5-sample loop)
def _reference_forward(feats, params, eps):
    outs = []
    for i, feat in enumerate(feats):
        w, b = params[i]
        if i == 3:
            mean, logvar = feat[:, :256], feat[:, 256:]
            std = jnp.exp(0.5 * logvar)
            acc = eps[0] * (std * 0.001) + mean
            for k in range(1, 5):
                acc = acc + (eps[k] * (std * 0.001) + mean)
            feat = acc / 5.0
        outs.append(feat @ w + b)
    return outs


# ----------------------------- main -----------------------------------------

if __name__ == "__main__":
    key = jax.random.PRNGKey(0)
    B = 8
    num_classes = 16
    feat_dims = [128, 256, 384, 512, 640]   # feats[3] carries 256 mean + 256 log-var
    in_dims = [128, 256, 384, 256, 640]     # classifier[3] sees the 256-d sampled feature

    n = len(feat_dims)
    keys = jax.random.split(key, 3 * n + 1)

    feats = [
        jax.random.normal(keys[i], (B, feat_dims[i]), jnp.float32)
        for i in range(n)
    ]
    params = [
        (
            jax.random.normal(keys[n + i], (in_dims[i], num_classes), jnp.float32) * 0.02,
            jax.random.normal(keys[2 * n + i], (1, num_classes), jnp.float32) * 0.01,
        )
        for i in range(n)
    ]
    eps = jax.random.normal(keys[3 * n], (5, B, 256), jnp.float32)

    # init-time fusion of the 5 heads into one block-diagonal weight / bias
    fused_w, fused_b = build_fused_params(params, num_classes)

    outs = mclassifier_forward(feats, fused_w, fused_b, eps, num_classes)
    for o in outs:
        jax.block_until_ready(o)

    refs = _reference_forward(feats, params, eps)
    for o, r in zip(outs, refs):
        assert o.shape == r.shape == (B, num_classes)
        assert jnp.allclose(o, r, atol=1e-4, rtol=1e-4)

    print("KERNEL_OK")
</pallas_src>

<mosaic_0001>
module attributes {stable_mosaic.version = 11 : i64} {
  func.func @_mclassifier_fused_kernel(%arg0: memref<8x128xf32, #tpu.memory_space<vmem>>, %arg1: memref<8x256xf32, #tpu.memory_space<vmem>>, %arg2: memref<8x384xf32, #tpu.memory_space<vmem>>, %arg3: memref<8x512xf32, #tpu.memory_space<vmem>>, %arg4: memref<8x640xf32, #tpu.memory_space<vmem>>, %arg5: memref<8x256xf32, #tpu.memory_space<vmem>>, %arg6: memref<1664x128xf32, #tpu.memory_space<vmem>>, %arg7: memref<1x128xf32, #tpu.memory_space<vmem>>, %arg8: memref<8x128xf32, #tpu.memory_space<vmem>>) attributes {dimension_semantics = [], scalar_prefetch = 0 : i64, scratch_operands = 0 : i64, tpu.core_type = #tpu.core_type<tc>} {
    %c0 = arith.constant 0 : index
    %c0_0 = arith.constant 0 : index
    %0 = vector.load %arg3[%c0, %c0_0] : memref<8x512xf32, #tpu.memory_space<vmem>>, vector<8x256xf32>
    %c0_1 = arith.constant 0 : index
    %c256 = arith.constant 256 : index
    %1 = vector.load %arg3[%c0_1, %c256] : memref<8x512xf32, #tpu.memory_space<vmem>>, vector<8x256xf32>
    %cst = arith.constant 5.000000e-01 : f32
    %2 = vector.broadcast %cst : f32 to vector<8x256xf32>
    %3 = arith.mulf %2, %1 : vector<8x256xf32>
    %4 = math.exp %3 : vector<8x256xf32>
    %cst_2 = arith.constant 1.000000e-03 : f32
    %5 = vector.broadcast %cst_2 : f32 to vector<8x256xf32>
    %6 = arith.mulf %4, %5 : vector<8x256xf32>
    %c0_3 = arith.constant 0 : index
    %c0_4 = arith.constant 0 : index
    %7 = vector.load %arg5[%c0_3, %c0_4] : memref<8x256xf32, #tpu.memory_space<vmem>>, vector<8x256xf32>
    %8 = arith.mulf %6, %7 : vector<8x256xf32>
    %9 = arith.addf %0, %8 : vector<8x256xf32>
    %c0_5 = arith.constant 0 : index
    %c0_6 = arith.constant 0 : index
    %10 = vector.load %arg0[%c0_5, %c0_6] : memref<8x128xf32, #tpu.memory_space<vmem>>, vector<8x128xf32>
    %c0_7 = arith.constant 0 : index
    %c0_8 = arith.constant 0 : index
    %11 = vector.load %arg1[%c0_7, %c0_8] : memref<8x256xf32, #tpu.memory_space<vmem>>, vector<8x256xf32>
    %c0_9 = arith.constant 0 : index
    %c0_10 = arith.constant 0 : index
    %12 = vector.load %arg2[%c0_9, %c0_10] : memref<8x384xf32, #tpu.memory_space<vmem>>, vector<8x384xf32>
    %c0_11 = arith.constant 0 : index
    %c0_12 = arith.constant 0 : index
    %13 = vector.load %arg4[%c0_11, %c0_12] : memref<8x640xf32, #tpu.memory_space<vmem>>, vector<8x640xf32>
    %14 = tpu.concatenate %10, %11, %12, %9, %13 in 1 : vector<8x128xf32>, vector<8x256xf32>, vector<8x384xf32>, vector<8x256xf32>, vector<8x640xf32> -> vector<8x1664xf32>
    %c0_13 = arith.constant 0 : index
    %c0_14 = arith.constant 0 : index
    %15 = vector.load %arg6[%c0_13, %c0_14] : memref<1664x128xf32, #tpu.memory_space<vmem>>, vector<1664x128xf32>
    %cst_15 = arith.constant dense<0.000000e+00> : vector<8x128xf32>
    %16 = tpu.matmul %14, %15, %cst_15 {dimension_numbers = #tpu.dot_dimension_numbers<[1], [0], [0], [1], [0, 0, 1, 1], [], []>} : vector<8x1664xf32>, vector<1664x128xf32>, vector<8x128xf32> -> vector<8x128xf32>
    %c0_16 = arith.constant 0 : index
    %c0_17 = arith.constant 0 : index
    %17 = vector.load %arg7[%c0_16, %c0_17] : memref<1x128xf32, #tpu.memory_space<vmem>>, vector<1x128xf32>
    %18 = vector.broadcast %17 : vector<1x128xf32> to vector<8x128xf32>
    %19 = arith.addf %16, %18 : vector<8x128xf32>
    %c0_18 = arith.constant 0 : index
    %c0_19 = arith.constant 0 : index
    %20 = vector.load %arg8[%c0_18, %c0_19] : memref<8x128xf32, #tpu.memory_space<vmem>>, vector<8x128xf32>
    tpu.vector_store %arg8[%c0_18, %c0_19], %19 {strides = array<i32>} : memref<8x128xf32, #tpu.memory_space<vmem>>, vector<8x128xf32>,
    return
  }
}

</mosaic_0001>

<llo_original>
// kernel: tpu_custom_call.1
$region0: #{tpu_custom_call.1}
  #allocation0 [shape = 'u32[]', space=smem, size = 0x4, offset = 0x4, fixed_abs, tag = 'smem constant byte address 0x4 - core index']
  #allocation1 [shape = 'u32[144,128]{1,0:T(1,128)}', space=vmem, size = 0x12000, scoped, tag = 'internal scratch']
  %s0 = inlined_call_operand.hbm [shape: f32[8,128], index: 0, kind: input, shape index: {}]
  %s1 = inlined_call_operand.hbm [shape: f32[8,256], index: 1, kind: input, shape index: {}]
  %s2 = inlined_call_operand.hbm [shape: f32[8,384], index: 2, kind: input, shape index: {}]
  %s3 = inlined_call_operand.hbm [shape: f32[8,512], index: 3, kind: input, shape index: {}]
  %s4 = inlined_call_operand.hbm [shape: f32[8,640], index: 4, kind: input, shape index: {}]
  %s5 = inlined_call_operand.vmem [shape: f32[8,256], index: 5, kind: input, shape index: {}]
  %s6 = inlined_call_operand.hbm [shape: f32[1664,128], index: 6, kind: input, shape index: {}]
  %s7 = inlined_call_operand.vmem [shape: f32[1,128], index: 7, kind: input, shape index: {}]
  %s8 = inlined_call_operand.hbm [shape: f32[8,128], index: 8, kind: output, shape index: {}]
  %s9 = sld [smem:[#allocation0]]
  $region66: #{tpu_custom_call.1} parent=0
    _
  %s11 = ssub.s32 1, %s9
  %s12 = scalar_select 0, %s11, %s9
  $region1: #{tpu_custom_call.1} parent=0
    #allocation2 [shape = 'u8[4096]{0}', space=vmem, size = 0x1000, scoped, tag = 'input window, operand 0, single buffered']
    #allocation3 [shape = 's32[1]{0}', space=sflag, size = 0x4, scoped, tag = 'scoped memory for tpu_custom_call.1']
    #allocation4 [shape = 's32[1]{0}', space=sflag, size = 0x4, scoped, tag = 'scoped memory for tpu_custom_call.1']
    #allocation5 [shape = 'u8[8192]{0}', space=vmem, size = 0x2000, scoped, tag = 'input window, operand 1, single buffered']
    #allocation6 [shape = 's32[1]{0}', space=sflag, size = 0x4, scoped, tag = 'scoped memory for tpu_custom_call.1']
    #allocation7 [shape = 'u8[12288]{0}', space=vmem, size = 0x3000, scoped, tag = 'input window, operand 2, single buffered']
    #allocation8 [shape = 'u8[16384]{0}', space=vmem, size = 0x4000, scoped, tag = 'input window, operand 3, single buffered']
    #allocation9 [shape = 's32[1]{0}', space=sflag, size = 0x4, scoped, tag = 'scoped memory for tpu_custom_call.1']
    #allocation10 [shape = 'u8[20480]{0}', space=vmem, size = 0x5000, scoped, tag = 'input window, operand 4, single buffered']
    #allocation11 [shape = 'u8[851968]{0}', space=vmem, size = 0xd0000, scoped, tag = 'input window, operand 6, single buffered']
    #allocation12 [shape = 's32[1]{0}', space=sflag, size = 0x4, scoped, tag = 'scoped memory for tpu_custom_call.1']
    #allocation13 [shape = 'u8[4096]{0}', space=vmem, size = 0x1000, scoped, tag = 'output window, operand 0, single buffered']
    %13 = vsyncpa [#allocation3], 0
    %14 = vsyncpa [#allocation6], 0
    %15 = vsyncpa [#allocation9], 0
    %16 = vsyncpa [#allocation12], 0
    %17 = vsyncpa [#allocation4], 0
    // Predicated region
    $region2: #{tpu_custom_call.1} parent=1 // pred_check
      _
    $region3: #{tpu_custom_call.1} parent=1 // pred_check_branch
      %19 = sbr.rel (0) target = $region5
    $region4: #{tpu_custom_call.1} parent=1 // pred_region
      %s21 = ssub.s32 128, 128
      %22 = vsyncadd [#allocation3], %s21
      %s24 = sshll.u32 [#allocation2], 4
      %s25 = int_to_ptr.vmem [resolvable:$true] %s24
      %27 = dma.hbm_to_vmem [thread:$0]  %s0, 128, %s25, [#allocation3]
    $region5: #{tpu_custom_call.1} parent=1 // pred_fallthru
      _
    // Predicated region
    $region6: #{tpu_custom_call.1} parent=1 // pred_check
      _
    $region7: #{tpu_custom_call.1} parent=1 // pred_check_branch
      %29 = sbr.rel (0) target = $region9
    $region8: #{tpu_custom_call.1} parent=1 // pred_region
      %s31 = ssub.s32 256, 256
      %32 = vsyncadd [#allocation6], %s31
      %s34 = sshll.u32 [#allocation5], 4
      %s35 = int_to_ptr.vmem [resolvable:$true] %s34
      %37 = dma.hbm_to_vmem [thread:$0]  %s1, 256, %s35, [#allocation6]
    $region9: #{tpu_custom_call.1} parent=1 // pred_fallthru
      _
    // Predicated region
    $region10: #{tpu_custom_call.1} parent=1 // pred_check
      _
    $region11: #{tpu_custom_call.1} parent=1 // pred_check_branch
      %39 = sbr.rel (0) target = $region13
    $region12: #{tpu_custom_call.1} parent=1 // pred_region
      %s41 = ssub.s32 384, 384
      %42 = vsyncadd [#allocation6], %s41
      %s44 = sshll.u32 [#allocation7], 4
      %s45 = int_to_ptr.vmem [resolvable:$true] %s44
      %47 = dma.hbm_to_vmem [thread:$0]  %s2, 384, %s45, [#allocation6]
    $region13: #{tpu_custom_call.1} parent=1 // pred_fallthru
      _
    // Predicated region
    $region14: #{tpu_custom_call.1} parent=1 // pred_check
      _
    $region15: #{tpu_custom_call.1} parent=1 // pred_check_branch
      %49 = sbr.rel (0) target = $region17
    $region16: #{tpu_custom_call.1} parent=1 // pred_region
      %s51 = ssub.s32 512, 512
      %52 = vsyncadd [#allocation9], %s51
      %s54 = sshll.u32 [#allocation8], 4
      %s55 = int_to_ptr.vmem [resolvable:$true] %s54
      %57 = dma.hbm_to_vmem [thread:$0]  %s3, 512, %s55, [#allocation9]
    $region17: #{tpu_custom_call.1} parent=1 // pred_fallthru
      _
    // Predicated region
    $region18: #{tpu_custom_call.1} parent=1 // pred_check
      _
    $region19: #{tpu_custom_call.1} parent=1 // pred_check_branch
      %59 = sbr.rel (0) target = $region21
    $region20: #{tpu_custom_call.1} parent=1 // pred_region
      %s61 = ssub.s32 640, 640
      %62 = vsyncadd [#allocation9], %s61
      %s64 = sshll.u32 [#allocation10], 4
      %s65 = int_to_ptr.vmem [resolvable:$true] %s64
      %67 = dma.hbm_to_vmem [thread:$0]  %s4, 640, %s65, [#allocation9]
    $region21: #{tpu_custom_call.1} parent=1 // pred_fallthru
      _
    // Predicated region
    $region22: #{tpu_custom_call.1} parent=1 // pred_check
      _
    $region23: #{tpu_custom_call.1} parent=1 // pred_check_branch
      %69 = sbr.rel (0) target = $region25
    $region24: #{tpu_custom_call.1} parent=1 // pred_region
      _
    $region25: #{tpu_custom_call.1} parent=1 // pred_fallthru
      _
    // Predicated region
    $region26: #{tpu_custom_call.1} parent=1 // pred_check
      _
    $region27: #{tpu_custom_call.1} parent=1 // pred_check_branch
      %71 = sbr.rel (0) target = $region29
    $region28: #{tpu_custom_call.1} parent=1 // pred_region
      %s73 = ssub.s32 26624, 26624
      %74 = vsyncadd [#allocation12], %s73
      %s75 = sshll.u32 [#allocation11], 4
      %s76 = int_to_ptr.vmem [resolvable:$true] %s75
      %81 = dma.hbm_to_vmem [thread:$0]  %s6, 26624, %s76, [#allocation12], 128, 128, 8
    $region29: #{tpu_custom_call.1} parent=1 // pred_fallthru
      _
    // Predicated region
    $region30: #{tpu_custom_call.1} parent=1 // pred_check
      _
    $region31: #{tpu_custom_call.1} parent=1 // pred_check_branch
      %83 = sbr.rel (0) target = $region33
    $region32: #{tpu_custom_call.1} parent=1 // pred_region
      _
    $region33: #{tpu_custom_call.1} parent=1 // pred_fallthru
      _
    // Predicated region
    $region34: #{tpu_custom_call.1} parent=1 // pred_check
      _
    $region35: #{tpu_custom_call.1} parent=1 // pred_check_branch
      %85 = sbr.rel (0) target = $region37
    $region36: #{tpu_custom_call.1} parent=1 // pred_region
      %86 = dma.done [#allocation3], 128
    $region37: #{tpu_custom_call.1} parent=1 // pred_fallthru
      _
    // Predicated region
    $region38: #{tpu_custom_call.1} parent=1 // pred_check
      _
    $region39: #{tpu_custom_call.1} parent=1 // pred_check_branch
      %88 = sbr.rel (0) target = $region41
    $region40: #{tpu_custom_call.1} parent=1 // pred_region
      %89 = dma.done [#allocation6], 256
    $region41: #{tpu_custom_call.1} parent=1 // pred_fallthru
      _
    // Predicated region
    $region42: #{tpu_custom_call.1} parent=1 // pred_check
      _
    $region43: #{tpu_custom_call.1} parent=1 // pred_check_branch
      %91 = sbr.rel (0) target = $region45
    $region44: #{tpu_custom_call.1} parent=1 // pred_region
      %92 = dma.done [#allocation6], 384
    $region45: #{tpu_custom_call.1} parent=1 // pred_fallthru
      _
    // Predicated region
    $region46: #{tpu_custom_call.1} parent=1 // pred_check
      _
    $region47: #{tpu_custom_call.1} parent=1 // pred_check_branch
      %94 = sbr.rel (0) target = $region49
    $region48: #{tpu_custom_call.1} parent=1 // pred_region
      %95 = dma.done [#allocation9], 512
    $region49: #{tpu_custom_call.1} parent=1 // pred_fallthru
      _
    // Predicated region
    $region50: #{tpu_custom_call.1} parent=1 // pred_check
      _
    $region51: #{tpu_custom_call.1} parent=1 // pred_check_branch
      %97 = sbr.rel (0) target = $region53
    $region52: #{tpu_custom_call.1} parent=1 // pred_region
      %98 = dma.done [#allocation9], 640
    $region53: #{tpu_custom_call.1} parent=1 // pred_fallthru
      _
    // Predicated region
    $region54: #{tpu_custom_call.1} parent=1 // pred_check
      _
    $region55: #{tpu_custom_call.1} parent=1 // pred_check_branch
      %100 = sbr.rel (0) target = $region57
    $region56: #{tpu_custom_call.1} parent=1 // pred_region
      %101 = dma.done [#allocation12], 26624
    $region57: #{tpu_custom_call.1} parent=1 // pred_fallthru
      _
    %v102 = vld [vmem:[#allocation8] sm:$0xff]
    %v103 = vld [vmem:[#allocation8 + $0x8] sm:$0xff]
    %v104 = vld [vmem:[#allocation8 + $0x10] sm:$0xff]
    %v105 = vld [vmem:[#allocation8 + $0x18] sm:$0xff]
    %v106 = vmul.f32 %v104, 0.5
    %v107 = vmul.f32 %v105, 0.5
    %v108 = vmul.f32 %v106, 1.442695
    %v109 = vpow.pop %v108
    %v110 = vmul.f32 %v107, 1.442695
    %v111 = vpow.pop %v110
    %v112 = vmul.f32 %v109, 0.001
    %v113 = vmul.f32 %v111, 0.001
    %v114 = vld [vmem:[%s5] sm:$0xff]
    %v115 = vld [vmem:[%s5 + $0x8] sm:$0xff]
    %v116 = vmul.f32 %v112, %v114
    %v117 = vmul.f32 %v113, %v115
    %v118 = vadd.f32 %v102, %v116
    %v119 = vadd.f32 %v103, %v117
    %v120 = vld [vmem:[#allocation2] sm:$0xff]
    %v121 = vld [vmem:[#allocation5] sm:$0xff]
    %v122 = vld [vmem:[#allocation5 + $0x8] sm:$0xff]
    %v123 = vld [vmem:[#allocation7] sm:$0xff]
    %v124 = vld [vmem:[#allocation7 + $0x8] sm:$0xff]
    %v125 = vld [vmem:[#allocation7 + $0x10] sm:$0xff]
    %v126 = vld [vmem:[#allocation10] sm:$0xff]
    %v127 = vld [vmem:[#allocation10 + $0x8] sm:$0xff]
    %v128 = vld [vmem:[#allocation10 + $0x10] sm:$0xff]
    %v129 = vld [vmem:[#allocation10 + $0x18] sm:$0xff]
    %v130 = vld [vmem:[#allocation10 + $0x20] sm:$0xff]
    %v131 = vld [vmem:[#allocation11] sm:$0xff]
    %v132 = vld [vmem:[#allocation11 + $0x8] sm:$0xff]
    %v133 = vld [vmem:[#allocation11 + $0x10] sm:$0xff]
    %v134 = vld [vmem:[#allocation11 + $0x18] sm:$0xff]
    %v135 = vld [vmem:[#allocation11 + $0x20] sm:$0xff]
    %v136 = vld [vmem:[#allocation11 + $0x28] sm:$0xff]
    %v137 = vld [vmem:[#allocation11 + $0x30] sm:$0xff]
    %v138 = vld [vmem:[#allocation11 + $0x38] sm:$0xff]
    %v139 = vld [vmem:[#allocation11 + $0x40] sm:$0xff]
    %v140 = vld [vmem:[#allocation11 + $0x48] sm:$0xff]
    %v141 = vld [vmem:[#allocation11 + $0x50] sm:$0xff]
    %v142 = vld [vmem:[#allocation11 + $0x58] sm:$0xff]
    %v143 = vld [vmem:[#allocation11 + $0x60] sm:$0xff]
    %v144 = vld [vmem:[#allocation11 + $0x68] sm:$0xff]
    %v145 = vld [vmem:[#allocation11 + $0x70] sm:$0xff]
    %v146 = vld [vmem:[#allocation11 + $0x78] sm:$0xff]
    %v147 = vld [vmem:[#allocation11 + $0x80] sm:$0xff]
    %v148 = vld [vmem:[#allocation11 + $0x88] sm:$0xff]
    %v149 = vld [vmem:[#allocation11 + $0x90] sm:$0xff]
    %v150 = vld [vmem:[#allocation11 + $0x98] sm:$0xff]
    %v151 = vld [vmem:[#allocation11 + $0xa0] sm:$0xff]
    %v152 = vld [vmem:[#allocation11 + $0xa8] sm:$0xff]
    %v153 = vld [vmem:[#allocation11 + $0xb0] sm:$0xff]
    %v154 = vld [vmem:[#allocation11 + $0xb8] sm:$0xff]
    %v155 = vld [vmem:[#allocation11 + $0xc0] sm:$0xff]
    %v156 = vld [vmem:[#allocation11 + $0xc8] sm:$0xff]
    %v157 = vld [vmem:[#allocation11 + $0xd0] sm:$0xff]
    %v158 = vld [vmem:[#allocation11 + $0xd8] sm:$0xff]
    %v159 = vld [vmem:[#allocation11 + $0xe0] sm:$0xff]
    %v160 = vld [vmem:[#allocation11 + $0xe8] sm:$0xff]
    %v161 = vld [vmem:[#allocation11 + $0xf0] sm:$0xff]
    %v162 = vld [vmem:[#allocation11 + $0xf8] sm:$0xff]
    %v163 = vld [vmem:[#allocation11 + $0x100] sm:$0xff]
    %v164 = vld [vmem:[#allocation11 + $0x108] sm:$0xff]
    %v165 = vld [vmem:[#allocation11 + $0x110] sm:$0xff]
    %v166 = vld [vmem:[#allocation11 + $0x118] sm:$0xff]
    %v167 = vld [vmem:[#allocation11 + $0x120] sm:$0xff]
    %v168 = vld [vmem:[#allocation11 + $0x128] sm:$0xff]
    %v169 = vld [vmem:[#allocation11 + $0x130] sm:$0xff]
    %v170 = vld [vmem:[#allocation11 + $0x138] sm:$0xff]
    %v171 = vld [vmem:[#allocation11 + $0x140] sm:$0xff]
    %v172 = vld [vmem:[#allocation11 + $0x148] sm:$0xff]
    %v173 = vld [vmem:[#allocation11 + $0x150] sm:$0xff]
    %v174 = vld [vmem:[#allocation11 + $0x158] sm:$0xff]
    %v175 = vld [vmem:[#allocation11 + $0x160] sm:$0xff]
    %v176 = vld [vmem:[#allocation11 + $0x168] sm:$0xff]
    %v177 = vld [vmem:[#allocation11 + $0x170] sm:$0xff]
    %v178 = vld [vmem:[#allocation11 + $0x178] sm:$0xff]
    %v179 = vld [vmem:[#allocation11 + $0x180] sm:$0xff]
    %v180 = vld [vmem:[#allocation11 + $0x188] sm:$0xff]
    %v181 = vld [vmem:[#allocation11 + $0x190] sm:$0xff]
    %v182 = vld [vmem:[#allocation11 + $0x198] sm:$0xff]
    %v183 = vld [vmem:[#allocation11 + $0x1a0] sm:$0xff]
    %v184 = vld [vmem:[#allocation11 + $0x1a8] sm:$0xff]
    %v185 = vld [vmem:[#allocation11 + $0x1b0] sm:$0xff]
    %v186 = vld [vmem:[#allocation11 + $0x1b8] sm:$0xff]
    %v187 = vld [vmem:[#allocation11 + $0x1c0] sm:$0xff]
    %v188 = vld [vmem:[#allocation11 + $0x1c8] sm:$0xff]
    %v189 = vld [vmem:[#allocation11 + $0x1d0] sm:$0xff]
    %v190 = vld [vmem:[#allocation11 + $0x1d8] sm:$0xff]
    %v191 = vld [vmem:[#allocation11 + $0x1e0] sm:$0xff]
    %v192 = vld [vmem:[#allocation11 + $0x1e8] sm:$0xff]
    %v193 = vld [vmem:[#allocation11 + $0x1f0] sm:$0xff]
    %v194 = vld [vmem:[#allocation11 + $0x1f8] sm:$0xff]
    %v195 = vld [vmem:[#allocation11 + $0x200] sm:$0xff]
    %v196 = vld [vmem:[#allocation11 + $0x208] sm:$0xff]
    %v197 = vld [vmem:[#allocation11 + $0x210] sm:$0xff]
    %v198 = vld [vmem:[#allocation11 + $0x218] sm:$0xff]
    %v199 = vld [vmem:[#allocation11 + $0x220] sm:$0xff]
    %v200 = vld [vmem:[#allocation11 + $0x228] sm:$0xff]
    %v201 = vld [vmem:[#allocation11 + $0x230] sm:$0xff]
    %v202 = vld [vmem:[#allocation11 + $0x238] sm:$0xff]
    %v203 = vld [vmem:[#allocation11 + $0x240] sm:$0xff]
    %v204 = vld [vmem:[#allocation11 + $0x248] sm:$0xff]
    %v205 = vld [vmem:[#allocation11 + $0x250] sm:$0xff]
    %v206 = vld [vmem:[#allocation11 + $0x258] sm:$0xff]
    %v207 = vld [vmem:[#allocation11 + $0x260] sm:$0xff]
    %v208 = vld [vmem:[#allocation11 + $0x268] sm:$0xff]
    %v209 = vld [vmem:[#allocation11 + $0x270] sm:$0xff]
    %v210 = vld [vmem:[#allocation11 + $0x278] sm:$0xff]
    %v211 = vld [vmem:[#allocation11 + $0x280] sm:$0xff]
    %v212 = vld [vmem:[#allocation11 + $0x288] sm:$0xff]
    %v213 = vld [vmem:[#allocation11 + $0x290] sm:$0xff]
    %v214 = vld [vmem:[#allocation11 + $0x298] sm:$0xff]
    %v215 = vld [vmem:[#allocation11 + $0x2a0] sm:$0xff]
    %v216 = vld [vmem:[#allocation11 + $0x2a8] sm:$0xff]
    %v217 = vld [vmem:[#allocation11 + $0x2b0] sm:$0xff]
    %v218 = vld [vmem:[#allocation11 + $0x2b8] sm:$0xff]
    %v219 = vld [vmem:[#allocation11 + $0x2c0] sm:$0xff]
    %v220 = vld [vmem:[#allocation11 + $0x2c8] sm:$0xff]
    %v221 = vld [vmem:[#allocation11 + $0x2d0] sm:$0xff]
    %v222 = vld [vmem:[#allocation11 + $0x2d8] sm:$0xff]
    %v223 = vld [vmem:[#allocation11 + $0x2e0] sm:$0xff]
    %v224 = vld [vmem:[#allocation11 + $0x2e8] sm:$0xff]
    %v225 = vld [vmem:[#allocation11 + $0x2f0] sm:$0xff]
    %v226 = vld [vmem:[#allocation11 + $0x2f8] sm:$0xff]
    %v227 = vld [vmem:[#allocation11 + $0x300] sm:$0xff]
    %v228 = vld [vmem:[#allocation11 + $0x308] sm:$0xff]
    %v229 = vld [vmem:[#allocation11 + $0x310] sm:$0xff]
    %v230 = vld [vmem:[#allocation11 + $0x318] sm:$0xff]
    %v231 = vld [vmem:[#allocation11 + $0x320] sm:$0xff]
    %v232 = vld [vmem:[#allocation11 + $0x328] sm:$0xff]
    %v233 = vld [vmem:[#allocation11 + $0x330] sm:$0xff]
    %v234 = vld [vmem:[#allocation11 + $0x338] sm:$0xff]
    %v235 = vld [vmem:[#allocation11 + $0x340] sm:$0xff]
    %v236 = vld [vmem:[#allocation11 + $0x348] sm:$0xff]
    %v237 = vld [vmem:[#allocation11 + $0x350] sm:$0xff]
    %v238 = vld [vmem:[#allocation11 + $0x358] sm:$0xff]
    %v239 = vld [vmem:[#allocation11 + $0x360] sm:$0xff]
    %v240 = vld [vmem:[#allocation11 + $0x368] sm:$0xff]
    %v241 = vld [vmem:[#allocation11 + $0x370] sm:$0xff]
    %v242 = vld [vmem:[#allocation11 + $0x378] sm:$0xff]
    %v243 = vld [vmem:[#allocation11 + $0x380] sm:$0xff]
    %v244 = vld [vmem:[#allocation11 + $0x388] sm:$0xff]
    %v245 = vld [vmem:[#allocation11 + $0x390] sm:$0xff]
    %v246 = vld [vmem:[#allocation11 + $0x398] sm:$0xff]
    %v247 = vld [vmem:[#allocation11 + $0x3a0] sm:$0xff]
    %v248 = vld [vmem:[#allocation11 + $0x3a8] sm:$0xff]
    %v249 = vld [vmem:[#allocation11 + $0x3b0] sm:$0xff]
    %v250 = vld [vmem:[#allocation11 + $0x3b8] sm:$0xff]
    %v251 = vld [vmem:[#allocation11 + $0x3c0] sm:$0xff]
    %v252 = vld [vmem:[#allocation11 + $0x3c8] sm:$0xff]
    %v253 = vld [vmem:[#allocation11 + $0x3d0] sm:$0xff]
    %v254 = vld [vmem:[#allocation11 + $0x3d8] sm:$0xff]
    %v255 = vld [vmem:[#allocation11 + $0x3e0] sm:$0xff]
    %v256 = vld [vmem:[#allocation11 + $0x3e8] sm:$0xff]
    %v257 = vld [vmem:[#allocation11 + $0x3f0] sm:$0xff]
    %v258 = vld [vmem:[#allocation11 + $0x3f8] sm:$0xff]
    %v259 = vld [vmem:[#allocation11 + $0x400] sm:$0xff]
    %v260 = vld [vmem:[#allocation11 + $0x408] sm:$0xff]
    %v261 = vld [vmem:[#allocation11 + $0x410] sm:$0xff]
    %v262 = vld [vmem:[#allocation11 + $0x418] sm:$0xff]
    %v263 = vld [vmem:[#allocation11 + $0x420] sm:$0xff]
    %v264 = vld [vmem:[#allocation11 + $0x428] sm:$0xff]
    %v265 = vld [vmem:[#allocation11 + $0x430] sm:$0xff]
    %v266 = vld [vmem:[#allocation11 + $0x438] sm:$0xff]
    %v267 = vld [vmem:[#allocation11 + $0x440] sm:$0xff]
    %v268 = vld [vmem:[#allocation11 + $0x448] sm:$0xff]
    %v269 = vld [vmem:[#allocation11 + $0x450] sm:$0xff]
    %v270 = vld [vmem:[#allocation11 + $0x458] sm:$0xff]
    %v271 = vld [vmem:[#allocation11 + $0x460] sm:$0xff]
    %v272 = vld [vmem:[#allocation11 + $0x468] sm:$0xff]
    %v273 = vld [vmem:[#allocation11 + $0x470] sm:$0xff]
    %v274 = vld [vmem:[#allocation11 + $0x478] sm:$0xff]
    %v275 = vld [vmem:[#allocation11 + $0x480] sm:$0xff]
    %v276 = vld [vmem:[#allocation11 + $0x488] sm:$0xff]
    %v277 = vld [vmem:[#allocation11 + $0x490] sm:$0xff]
    %v278 = vld [vmem:[#allocation11 + $0x498] sm:$0xff]
    %v279 = vld [vmem:[#allocation11 + $0x4a0] sm:$0xff]
    %v280 = vld [vmem:[#allocation11 + $0x4a8] sm:$0xff]
    %v281 = vld [vmem:[#allocation11 + $0x4b0] sm:$0xff]
    %v282 = vld [vmem:[#allocation11 + $0x4b8] sm:$0xff]
    %v283 = vld [vmem:[#allocation11 + $0x4c0] sm:$0xff]
    %v284 = vld [vmem:[#allocation11 + $0x4c8] sm:$0xff]
    %v285 = vld [vmem:[#allocation11 + $0x4d0] sm:$0xff]
    %v286 = vld [vmem:[#allocation11 + $0x4d8] sm:$0xff]
    %v287 = vld [vmem:[#allocation11 + $0x4e0] sm:$0xff]
    %v288 = vld [vmem:[#allocation11 + $0x4e8] sm:$0xff]
    %v289 = vld [vmem:[#allocation11 + $0x4f0] sm:$0xff]
    %v290 = vld [vmem:[#allocation11 + $0x4f8] sm:$0xff]
    %v291 = vld [vmem:[#allocation11 + $0x500] sm:$0xff]
    %v292 = vld [vmem:[#allocation11 + $0x508] sm:$0xff]
    %v293 = vld [vmem:[#allocation11 + $0x510] sm:$0xff]
    %v294 = vld [vmem:[#allocation11 + $0x518] sm:$0xff]
    %v295 = vld [vmem:[#allocation11 + $0x520] sm:$0xff]
    %v296 = vld [vmem:[#allocation11 + $0x528] sm:$0xff]
    %v297 = vld [vmem:[#allocation11 + $0x530] sm:$0xff]
    %v298 = vld [vmem:[#allocation11 + $0x538] sm:$0xff]
    %v299 = vld [vmem:[#allocation11 + $0x540] sm:$0xff]
    %v300 = vld [vmem:[#allocation11 + $0x548] sm:$0xff]
    %v301 = vld [vmem:[#allocation11 + $0x550] sm:$0xff]
    %v302 = vld [vmem:[#allocation11 + $0x558] sm:$0xff]
    %v303 = vld [vmem:[#allocation11 + $0x560] sm:$0xff]
    %v304 = vld [vmem:[#allocation11 + $0x568] sm:$0xff]
    %v305 = vld [vmem:[#allocation11 + $0x570] sm:$0xff]
    %v306 = vld [vmem:[#allocation11 + $0x578] sm:$0xff]
    %v307 = vld [vmem:[#allocation11 + $0x580] sm:$0xff]
    %v308 = vld [vmem:[#allocation11 + $0x588] sm:$0xff]
    %v309 = vld [vmem:[#allocation11 + $0x590] sm:$0xff]
    %v310 = vld [vmem:[#allocation11 + $0x598] sm:$0xff]
    %v311 = vld [vmem:[#allocation11 + $0x5a0] sm:$0xff]
    %v312 = vld [vmem:[#allocation11 + $0x5a8] sm:$0xff]
    %v313 = vld [vmem:[#allocation11 + $0x5b0] sm:$0xff]
    %v314 = vld [vmem:[#allocation11 + $0x5b8] sm:$0xff]
    %v315 = vld [vmem:[#allocation11 + $0x5c0] sm:$0xff]
    %v316 = vld [vmem:[#allocation11 + $0x5c8] sm:$0xff]
    %v317 = vld [vmem:[#allocation11 + $0x5d0] sm:$0xff]
    %v318 = vld [vmem:[#allocation11 + $0x5d8] sm:$0xff]
    %v319 = vld [vmem:[#allocation11 + $0x5e0] sm:$0xff]
    %v320 = vld [vmem:[#allocation11 + $0x5e8] sm:$0xff]
    %v321 = vld [vmem:[#allocation11 + $0x5f0] sm:$0xff]
    %v322 = vld [vmem:[#allocation11 + $0x5f8] sm:$0xff]
    %v323 = vld [vmem:[#allocation11 + $0x600] sm:$0xff]
    %v324 = vld [vmem:[#allocation11 + $0x608] sm:$0xff]
    %v325 = vld [vmem:[#allocation11 + $0x610] sm:$0xff]
    %v326 = vld [vmem:[#allocation11 + $0x618] sm:$0xff]
    %v327 = vld [vmem:[#allocation11 + $0x620] sm:$0xff]
    %v328 = vld [vmem:[#allocation11 + $0x628] sm:$0xff]
    %v329 = vld [vmem:[#allocation11 + $0x630] sm:$0xff]
    %v330 = vld [vmem:[#allocation11 + $0x638] sm:$0xff]
    %v331 = vld [vmem:[#allocation11 + $0x640] sm:$0xff]
    %v332 = vld [vmem:[#allocation11 + $0x648] sm:$0xff]
    %v333 = vld [vmem:[#allocation11 + $0x650] sm:$0xff]
    %v334 = vld [vmem:[#allocation11 + $0x658] sm:$0xff]
    %v335 = vld [vmem:[#allocation11 + $0x660] sm:$0xff]
    %v336 = vld [vmem:[#allocation11 + $0x668] sm:$0xff]
    %v337 = vld [vmem:[#allocation11 + $0x670] sm:$0xff]
    %v338 = vld [vmem:[#allocation11 + $0x678] sm:$0xff]
    %v339 = vld [vmem:[%s7] sm:$0x1]
    %v341 = vlaneseq
    %v342 = vshrl.u32 %v341, 7
    %v343 = vsub.s32 0, %v342
    %v344 = vrot.slane %v339, %v343
    %346 = vmatprep.subr.mxu0 0.0
    %347 = vmatpush1.msra.mxu0 %v131
    %348 = vmatprep.subr.mxu0 0.0
    %349 = vmatpush1.msra.mxu0 %v132
    %350 = vmatprep.subr.mxu0 0.0
    %351 = vmatpush1.msra.mxu0 %v133
    %352 = vmatprep.subr.mxu0 0.0
    %353 = vmatpush1.msra.mxu0 %v134
    %354 = vmatprep.subr.mxu0 0.0
    %355 = vmatpush1.msra.mxu0 %v135
    %356 = vmatprep.subr.mxu0 0.0
    %357 = vmatpush1.msra.mxu0 %v136
    %358 = vmatprep.subr.mxu0 0.0
    %359 = vmatpush1.msra.mxu0 %v137
    %360 = vmatprep.subr.mxu0 0.0
    %361 = vmatpush1.msra.mxu0 %v138
    %362 = vmatprep.subr.mxu0 0.0
    %363 = vmatpush1.msra.mxu0 %v139
    %364 = vmatprep.subr.mxu0 0.0
    %365 = vmatpush1.msra.mxu0 %v140
    %366 = vmatprep.subr.mxu0 0.0
    %367 = vmatpush1.msra.mxu0 %v141
    %368 = vmatprep.subr.mxu0 0.0
    %369 = vmatpush1.msra.mxu0 %v142
    %370 = vmatprep.subr.mxu0 0.0
    %371 = vmatpush1.msra.mxu0 %v143
    %372 = vmatprep.subr.mxu0 0.0
    %373 = vmatpush1.msra.mxu0 %v144
    %374 = vmatprep.subr.mxu0 0.0
    %375 = vmatpush1.msra.mxu0 %v145
    %376 = vmatprep.subr.mxu0 0.0
    %377 = vmatpush1.msra.mxu0 %v146
    %378 = vmatprep.subr.mxu0 0.0
    %379 = vmatpush1.msra.mxu0 %v147
    %380 = vmatprep.subr.mxu0 0.0
    %381 = vmatpush1.msra.mxu0 %v148
    %382 = vmatprep.subr.mxu0 0.0
    %383 = vmatpush1.msra.mxu0 %v149
    %384 = vmatprep.subr.mxu0 0.0
    %385 = vmatpush1.msra.mxu0 %v150
    %386 = vmatprep.subr.mxu0 0.0
    %387 = vmatpush1.msra.mxu0 %v151
    %388 = vmatprep.subr.mxu0 0.0
    %389 = vmatpush1.msra.mxu0 %v152
    %390 = vmatprep.subr.mxu0 0.0
    %391 = vmatpush1.msra.mxu0 %v153
    %392 = vmatprep.subr.mxu0 0.0
    %393 = vmatpush1.msra.mxu0 %v154
    %394 = vmatprep.subr.mxu0 0.0
    %395 = vmatpush1.msra.mxu0 %v155
    %396 = vmatprep.subr.mxu0 0.0
    %397 = vmatpush1.msra.mxu0 %v156
    %398 = vmatprep.subr.mxu0 0.0
    %399 = vmatpush1.msra.mxu0 %v157
    %400 = vmatprep.subr.mxu0 0.0
    %401 = vmatpush1.msra.mxu0 %v158
    %402 = vmatprep.subr.mxu0 0.0
    %403 = vmatpush1.msra.mxu0 %v159
    %404 = vmatprep.subr.mxu0 0.0
    %405 = vmatpush1.msra.mxu0 %v160
    %406 = vmatprep.subr.mxu0 0.0
    %407 = vmatpush1.msra.mxu0 %v161
    %408 = vmatprep.subr.mxu0 0.0
    %409 = vmatpush1.msra.mxu0 %v162
    %410 = vmatprep.mubr.f32.mxu0 %v121
    %411 = vmatmul.mubr.f32.gmra.mrb[0].mxu0 %v120
    %v412 = vpop.f32.mrb[0].mxu0
    %v413 = vadd.f32 %v344, %v412
    %v414 = vpop.f32.mrb[0].mxu0
    %415 = vdwg.mxu0
    %416 = vmatprep.subr.mxu0 0.0
    %417 = vmatpush1.msra.mxu0 %v163
    %418 = vmatprep.subr.mxu0 0.0
    %419 = vmatpush1.msra.mxu0 %v164
    %420 = vmatprep.subr.mxu0 0.0
    %421 = vmatpush1.msra.mxu0 %v165
    %422 = vmatprep.subr.mxu0 0.0
    %423 = vmatpush1.msra.mxu0 %v166
    %424 = vmatprep.subr.mxu0 0.0
    %425 = vmatpush1.msra.mxu0 %v167
    %426 = vmatprep.subr.mxu0 0.0
    %427 = vmatpush1.msra.mxu0 %v168
    %428 = vmatprep.subr.mxu0 0.0
    %429 = vmatpush1.msra.mxu0 %v169
    %430 = vmatprep.subr.mxu0 0.0
    %431 = vmatpush1.msra.mxu0 %v170
    %432 = vmatprep.subr.mxu0 0.0
    %433 = vmatpush1.msra.mxu0 %v171
    %434 = vmatprep.subr.mxu0 0.0
    %435 = vmatpush1.msra.mxu0 %v172
    %436 = vmatprep.subr.mxu0 0.0
    %437 = vmatpush1.msra.mxu0 %v173
    %438 = vmatprep.subr.mxu0 0.0
    %439 = vmatpush1.msra.mxu0 %v174
    %440 = vmatprep.subr.mxu0 0.0
    %441 = vmatpush1.msra.mxu0 %v175
    %442 = vmatprep.subr.mxu0 0.0
    %443 = vmatpush1.msra.mxu0 %v176
    %444 = vmatprep.subr.mxu0 0.0
    %445 = vmatpush1.msra.mxu0 %v177
    %446 = vmatprep.subr.mxu0 0.0
    %447 = vmatpush1.msra.mxu0 %v178
    %448 = vmatprep.subr.mxu0 0.0
    %449 = vmatpush1.msra.mxu0 %v179
    %450 = vmatprep.subr.mxu0 0.0
    %451 = vmatpush1.msra.mxu0 %v180
    %452 = vmatprep.subr.mxu0 0.0
    %453 = vmatpush1.msra.mxu0 %v181
    %454 = vmatprep.subr.mxu0 0.0
    %455 = vmatpush1.msra.mxu0 %v182
    %456 = vmatprep.subr.mxu0 0.0
    %457 = vmatpush1.msra.mxu0 %v183
    %458 = vmatprep.subr.mxu0 0.0
    %459 = vmatpush1.msra.mxu0 %v184
    %460 = vmatprep.subr.mxu0 0.0
    %461 = vmatpush1.msra.mxu0 %v185
    %462 = vmatprep.subr.mxu0 0.0
    %463 = vmatpush1.msra.mxu0 %v186
    %464 = vmatprep.subr.mxu0 0.0
    %465 = vmatpush1.msra.mxu0 %v187
    %466 = vmatprep.subr.mxu0 0.0
    %467 = vmatpush1.msra.mxu0 %v188
    %468 = vmatprep.subr.mxu0 0.0
    %469 = vmatpush1.msra.mxu0 %v189
    %470 = vmatprep.subr.mxu0 0.0
    %471 = vmatpush1.msra.mxu0 %v190
    %472 = vmatprep.subr.mxu0 0.0
    %473 = vmatpush1.msra.mxu0 %v191
    %474 = vmatprep.subr.mxu0 0.0
    %475 = vmatpush1.msra.mxu0 %v192
    %476 = vmatprep.subr.mxu0 0.0
    %477 = vmatpush1.msra.mxu0 %v193
    %478 = vmatprep.subr.mxu0 0.0
    %479 = vmatpush1.msra.mxu0 %v194
    %480 = vmatprep.mubr.f32.mxu0 %v123
    %481 = vmatmul.mubr.f32.gmra.mrb[0].mxu0 %v122
    %v482 = vpop.f32.mrb[0].mxu0
    %v483 = vadd.f32 %v413, %v482
    %v484 = vpop.f32.mrb[0].mxu0
    %485 = vdwg.mxu0
    %486 = vmatprep.subr.mxu0 0.0
    %487 = vmatpush1.msra.mxu0 %v195
    %488 = vmatprep.subr.mxu0 0.0
    %489 = vmatpush1.msra.mxu0 %v196
    %490 = vmatprep.subr.mxu0 0.0
    %491 = vmatpush1.msra.mxu0 %v197
    %492 = vmatprep.subr.mxu0 0.0
    %493 = vmatpush1.msra.mxu0 %v198
    %494 = vmatprep.subr.mxu0 0.0
    %495 = vmatpush1.msra.mxu0 %v199
    %496 = vmatprep.subr.mxu0 0.0
    %497 = vmatpush1.msra.mxu0 %v200
    %498 = vmatprep.subr.mxu0 0.0
    %499 = vmatpush1.msra.mxu0 %v201
    %500 = vmatprep.subr.mxu0 0.0
    %501 = vmatpush1.msra.mxu0 %v202
    %502 = vmatprep.subr.mxu0 0.0
    %503 = vmatpush1.msra.mxu0 %v203
    %504 = vmatprep.subr.mxu0 0.0
    %505 = vmatpush1.msra.mxu0 %v204
    %506 = vmatprep.subr.mxu0 0.0
    %507 = vmatpush1.msra.mxu0 %v205
    %508 = vmatprep.subr.mxu0 0.0
    %509 = vmatpush1.msra.mxu0 %v206
    %510 = vmatprep.subr.mxu0 0.0
    %511 = vmatpush1.msra.mxu0 %v207
    %512 = vmatprep.subr.mxu0 0.0
    %513 = vmatpush1.msra.mxu0 %v208
    %514 = vmatprep.subr.mxu0 0.0
    %515 = vmatpush1.msra.mxu0 %v209
    %516 = vmatprep.subr.mxu0 0.0
    %517 = vmatpush1.msra.mxu0 %v210
    %518 = vmatprep.subr.mxu0 0.0
    %519 = vmatpush1.msra.mxu0 %v211
    %520 = vmatprep.subr.mxu0 0.0
    %521 = vmatpush1.msra.mxu0 %v212
    %522 = vmatprep.subr.mxu0 0.0
    %523 = vmatpush1.msra.mxu0 %v213
    %524 = vmatprep.subr.mxu0 0.0
    %525 = vmatpush1.msra.mxu0 %v214
    %526 = vmatprep.subr.mxu0 0.0
    %527 = vmatpush1.msra.mxu0 %v215
    %528 = vmatprep.subr.mxu0 0.0
    %529 = vmatpush1.msra.mxu0 %v216
    %530 = vmatprep.subr.mxu0 0.0
    %531 = vmatpush1.msra.mxu0 %v217
    %532 = vmatprep.subr.mxu0 0.0
    %533 = vmatpush1.msra.mxu0 %v218
    %534 = vmatprep.subr.mxu0 0.0
    %535 = vmatpush1.msra.mxu0 %v219
    %536 = vmatprep.subr.mxu0 0.0
    %537 = vmatpush1.msra.mxu0 %v220
    %538 = vmatprep.subr.mxu0 0.0
    %539 = vmatpush1.msra.mxu0 %v221
    %540 = vmatprep.subr.mxu0 0.0
    %541 = vmatpush1.msra.mxu0 %v222
    %542 = vmatprep.subr.mxu0 0.0
    %543 = vmatpush1.msra.mxu0 %v223
    %544 = vmatprep.subr.mxu0 0.0
    %545 = vmatpush1.msra.mxu0 %v224
    %546 = vmatprep.subr.mxu0 0.0
    %547 = vmatpush1.msra.mxu0 %v225
    %548 = vmatprep.subr.mxu0 0.0
    %549 = vmatpush1.msra.mxu0 %v226
    %550 = vmatprep.mubr.f32.mxu0 %v125
    %551 = vmatmul.mubr.f32.gmra.mrb[0].mxu0 %v124
    %v552 = vpop.f32.mrb[0].mxu0
    %v553 = vadd.f32 %v483, %v552
    %v554 = vpop.f32.mrb[0].mxu0
    %555 = vdwg.mxu0
    %556 = vmatprep.subr.mxu0 0.0
    %557 = vmatpush1.msra.mxu0 %v227
    %558 = vmatprep.subr.mxu0 0.0
    %559 = vmatpush1.msra.mxu0 %v228
    %560 = vmatprep.subr.mxu0 0.0
    %561 = vmatpush1.msra.mxu0 %v229
    %562 = vmatprep.subr.mxu0 0.0
    %563 = vmatpush1.msra.mxu0 %v230
    %564 = vmatprep.subr.mxu0 0.0
    %565 = vmatpush1.msra.mxu0 %v231
    %566 = vmatprep.subr.mxu0 0.0
    %567 = vmatpush1.msra.mxu0 %v232
    %568 = vmatprep.subr.mxu0 0.0
    %569 = vmatpush1.msra.mxu0 %v233
    %570 = vmatprep.subr.mxu0 0.0
    %571 = vmatpush1.msra.mxu0 %v234
    %572 = vmatprep.subr.mxu0 0.0
    %573 = vmatpush1.msra.mxu0 %v235
    %574 = vmatprep.subr.mxu0 0.0
    %575 = vmatpush1.msra.mxu0 %v236
    %576 = vmatprep.subr.mxu0 0.0
    %577 = vmatpush1.msra.mxu0 %v237
    %578 = vmatprep.subr.mxu0 0.0
    %579 = vmatpush1.msra.mxu0 %v238
    %580 = vmatprep.subr.mxu0 0.0
    %581 = vmatpush1.msra.mxu0 %v239
    %582 = vmatprep.subr.mxu0 0.0
    %583 = vmatpush1.msra.mxu0 %v240
    %584 = vmatprep.subr.mxu0 0.0
    %585 = vmatpush1.msra.mxu0 %v241
    %586 = vmatprep.subr.mxu0 0.0
    %587 = vmatpush1.msra.mxu0 %v242
    %588 = vmatprep.subr.mxu0 0.0
    %589 = vmatpush1.msra.mxu0 %v243
    %590 = vmatprep.subr.mxu0 0.0
    %591 = vmatpush1.msra.mxu0 %v244
    %592 = vmatprep.subr.mxu0 0.0
    %593 = vmatpush1.msra.mxu0 %v245
    %594 = vmatprep.subr.mxu0 0.0
    %595 = vmatpush1.msra.mxu0 %v246
    %596 = vmatprep.subr.mxu0 0.0
    %597 = vmatpush1.msra.mxu0 %v247
    %598 = vmatprep.subr.mxu0 0.0
    %599 = vmatpush1.msra.mxu0 %v248
    %600 = vmatprep.subr.mxu0 0.0
    %601 = vmatpush1.msra.mxu0 %v249
    %602 = vmatprep.subr.mxu0 0.0
    %603 = vmatpush1.msra.mxu0 %v250
    %604 = vmatprep.subr.mxu0 0.0
    %605 = vmatpush1.msra.mxu0 %v251
    %606 = vmatprep.subr.mxu0 0.0
    %607 = vmatpush1.msra.mxu0 %v252
    %608 = vmatprep.subr.mxu0 0.0
    %609 = vmatpush1.msra.mxu0 %v253
    %610 = vmatprep.subr.mxu0 0.0
    %611 = vmatpush1.msra.mxu0 %v254
    %612 = vmatprep.subr.mxu0 0.0
    %613 = vmatpush1.msra.mxu0 %v255
    %614 = vmatprep.subr.mxu0 0.0
    %615 = vmatpush1.msra.mxu0 %v256
    %616 = vmatprep.subr.mxu0 0.0
    %617 = vmatpush1.msra.mxu0 %v257
    %618 = vmatprep.subr.mxu0 0.0
    %619 = vmatpush1.msra.mxu0 %v258
    %620 = vmatprep.mubr.f32.mxu0 %v119
    %621 = vmatmul.mubr.f32.gmra.mrb[0].mxu0 %v118
    %v622 = vpop.f32.mrb[0].mxu0
    %v623 = vadd.f32 %v553, %v622
    %v624 = vpop.f32.mrb[0].mxu0
    %625 = vdwg.mxu0
    %626 = vmatprep.subr.mxu0 0.0
    %627 = vmatpush1.msra.mxu0 %v259
    %628 = vmatprep.subr.mxu0 0.0
    %629 = vmatpush1.msra.mxu0 %v260
    %630 = vmatprep.subr.mxu0 0.0
    %631 = vmatpush1.msra.mxu0 %v261
    %632 = vmatprep.subr.mxu0 0.0
    %633 = vmatpush1.msra.mxu0 %v262
    %634 = vmatprep.subr.mxu0 0.0
    %635 = vmatpush1.msra.mxu0 %v263
    %636 = vmatprep.subr.mxu0 0.0
    %637 = vmatpush1.msra.mxu0 %v264
    %638 = vmatprep.subr.mxu0 0.0
    %639 = vmatpush1.msra.mxu0 %v265
    %640 = vmatprep.subr.mxu0 0.0
    %641 = vmatpush1.msra.mxu0 %v266
    %642 = vmatprep.subr.mxu0 0.0
    %643 = vmatpush1.msra.mxu0 %v267
    %644 = vmatprep.subr.mxu0 0.0
    %645 = vmatpush1.msra.mxu0 %v268
    %646 = vmatprep.subr.mxu0 0.0
    %647 = vmatpush1.msra.mxu0 %v269
    %648 = vmatprep.subr.mxu0 0.0
    %649 = vmatpush1.msra.mxu0 %v270
    %650 = vmatprep.subr.mxu0 0.0
    %651 = vmatpush1.msra.mxu0 %v271
    %652 = vmatprep.subr.mxu0 0.0
    %653 = vmatpush1.msra.mxu0 %v272
    %654 = vmatprep.subr.mxu0 0.0
    %655 = vmatpush1.msra.mxu0 %v273
    %656 = vmatprep.subr.mxu0 0.0
    %657 = vmatpush1.msra.mxu0 %v274
    %658 = vmatprep.subr.mxu0 0.0
    %659 = vmatpush1.msra.mxu0 %v275
    %660 = vmatprep.subr.mxu0 0.0
    %661 = vmatpush1.msra.mxu0 %v276
    %662 = vmatprep.subr.mxu0 0.0
    %663 = vmatpush1.msra.mxu0 %v277
    %664 = vmatprep.subr.mxu0 0.0
    %665 = vmatpush1.msra.mxu0 %v278
    %666 = vmatprep.subr.mxu0 0.0
    %667 = vmatpush1.msra.mxu0 %v279
    %668 = vmatprep.subr.mxu0 0.0
    %669 = vmatpush1.msra.mxu0 %v280
    %670 = vmatprep.subr.mxu0 0.0
    %671 = vmatpush1.msra.mxu0 %v281
    %672 = vmatprep.subr.mxu0 0.0
    %673 = vmatpush1.msra.mxu0 %v282
    %674 = vmatprep.subr.mxu0 0.0
    %675 = vmatpush1.msra.mxu0 %v283
    %676 = vmatprep.subr.mxu0 0.0
    %677 = vmatpush1.msra.mxu0 %v284
    %678 = vmatprep.subr.mxu0 0.0
    %679 = vmatpush1.msra.mxu0 %v285
    %680 = vmatprep.subr.mxu0 0.0
    %681 = vmatpush1.msra.mxu0 %v286
    %682 = vmatprep.subr.mxu0 0.0
    %683 = vmatpush1.msra.mxu0 %v287
    %684 = vmatprep.subr.mxu0 0.0
    %685 = vmatpush1.msra.mxu0 %v288
    %686 = vmatprep.subr.mxu0 0.0
    %687 = vmatpush1.msra.mxu0 %v289
    %688 = vmatprep.subr.mxu0 0.0
    %689 = vmatpush1.msra.mxu0 %v290
    %690 = vmatprep.mubr.f32.mxu0 %v127
    %691 = vmatmul.mubr.f32.gmra.mrb[0].mxu0 %v126
    %v692 = vpop.f32.mrb[0].mxu0
    %v693 = vadd.f32 %v623, %v692
    %v694 = vpop.f32.mrb[0].mxu0
    %695 = vdwg.mxu0
    %696 = vmatprep.subr.mxu0 0.0
    %697 = vmatpush1.msra.mxu0 %v291
    %698 = vmatprep.subr.mxu0 0.0
    %699 = vmatpush1.msra.mxu0 %v292
    %700 = vmatprep.subr.mxu0 0.0
    %701 = vmatpush1.msra.mxu0 %v293
    %702 = vmatprep.subr.mxu0 0.0
    %703 = vmatpush1.msra.mxu0 %v294
    %704 = vmatprep.subr.mxu0 0.0
    %705 = vmatpush1.msra.mxu0 %v295
    %706 = vmatprep.subr.mxu0 0.0
    %707 = vmatpush1.msra.mxu0 %v296
    %708 = vmatprep.subr.mxu0 0.0
    %709 = vmatpush1.msra.mxu0 %v297
    %710 = vmatprep.subr.mxu0 0.0
    %711 = vmatpush1.msra.mxu0 %v298
    %712 = vmatprep.subr.mxu0 0.0
    %713 = vmatpush1.msra.mxu0 %v299
    %714 = vmatprep.subr.mxu0 0.0
    %715 = vmatpush1.msra.mxu0 %v300
    %716 = vmatprep.subr.mxu0 0.0
    %717 = vmatpush1.msra.mxu0 %v301
    %718 = vmatprep.subr.mxu0 0.0
    %719 = vmatpush1.msra.mxu0 %v302
    %720 = vmatprep.subr.mxu0 0.0
    %721 = vmatpush1.msra.mxu0 %v303
    %722 = vmatprep.subr.mxu0 0.0
    %723 = vmatpush1.msra.mxu0 %v304
    %724 = vmatprep.subr.mxu0 0.0
    %725 = vmatpush1.msra.mxu0 %v305
    %726 = vmatprep.subr.mxu0 0.0
    %727 = vmatpush1.msra.mxu0 %v306
    %728 = vmatprep.subr.mxu0 0.0
    %729 = vmatpush1.msra.mxu0 %v307
    %730 = vmatprep.subr.mxu0 0.0
    %731 = vmatpush1.msra.mxu0 %v308
    %732 = vmatprep.subr.mxu0 0.0
    %733 = vmatpush1.msra.mxu0 %v309
    %734 = vmatprep.subr.mxu0 0.0
    %735 = vmatpush1.msra.mxu0 %v310
    %736 = vmatprep.subr.mxu0 0.0
    %737 = vmatpush1.msra.mxu0 %v311
    %738 = vmatprep.subr.mxu0 0.0
    %739 = vmatpush1.msra.mxu0 %v312
    %740 = vmatprep.subr.mxu0 0.0
    %741 = vmatpush1.msra.mxu0 %v313
    %742 = vmatprep.subr.mxu0 0.0
    %743 = vmatpush1.msra.mxu0 %v314
    %744 = vmatprep.subr.mxu0 0.0
    %745 = vmatpush1.msra.mxu0 %v315
    %746 = vmatprep.subr.mxu0 0.0
    %747 = vmatpush1.msra.mxu0 %v316
    %748 = vmatprep.subr.mxu0 0.0
    %749 = vmatpush1.msra.mxu0 %v317
    %750 = vmatprep.subr.mxu0 0.0
    %751 = vmatpush1.msra.mxu0 %v318
    %752 = vmatprep.subr.mxu0 0.0
    %753 = vmatpush1.msra.mxu0 %v319
    %754 = vmatprep.subr.mxu0 0.0
    %755 = vmatpush1.msra.mxu0 %v320
    %756 = vmatprep.subr.mxu0 0.0
    %757 = vmatpush1.msra.mxu0 %v321
    %758 = vmatprep.subr.mxu0 0.0
    %759 = vmatpush1.msra.mxu0 %v322
    %760 = vmatprep.mubr.f32.mxu0 %v129
    %761 = vmatmul.mubr.f32.gmra.mrb[0].mxu0 %v128
    %v762 = vpop.f32.mrb[0].mxu0
    %v763 = vadd.f32 %v693, %v762
    %v764 = vpop.f32.mrb[0].mxu0
    %765 = vdwg.mxu0
    %766 = vmatprep.subr.mxu0 0.0
    %767 = vmatpush1.msra.mxu0 %v323
    %768 = vmatprep.subr.mxu0 0.0
    %769 = vmatpush1.msra.mxu0 %v324
    %770 = vmatprep.subr.mxu0 0.0
    %771 = vmatpush1.msra.mxu0 %v325
    %772 = vmatprep.subr.mxu0 0.0
    %773 = vmatpush1.msra.mxu0 %v326
    %774 = vmatprep.subr.mxu0 0.0
    %775 = vmatpush1.msra.mxu0 %v327
    %776 = vmatprep.subr.mxu0 0.0
    %777 = vmatpush1.msra.mxu0 %v328
    %778 = vmatprep.subr.mxu0 0.0
    %779 = vmatpush1.msra.mxu0 %v329
    %780 = vmatprep.subr.mxu0 0.0
    %781 = vmatpush1.msra.mxu0 %v330
    %782 = vmatprep.subr.mxu0 0.0
    %783 = vmatpush1.msra.mxu0 %v331
    %784 = vmatprep.subr.mxu0 0.0
    %785 = vmatpush1.msra.mxu0 %v332
    %786 = vmatprep.subr.mxu0 0.0
    %787 = vmatpush1.msra.mxu0 %v333
    %788 = vmatprep.subr.mxu0 0.0
    %789 = vmatpush1.msra.mxu0 %v334
    %790 = vmatprep.subr.mxu0 0.0
    %791 = vmatpush1.msra.mxu0 %v335
    %792 = vmatprep.subr.mxu0 0.0
    %793 = vmatpush1.msra.mxu0 %v336
    %794 = vmatprep.subr.mxu0 0.0
    %795 = vmatpush1.msra.mxu0 %v337
    %796 = vmatprep.subr.mxu0 0.0
    %797 = vmatpush1.msra.mxu0 %v338
    %798 = vmatprep.subr.mxu0 0.0
    %799 = vmatpush1.msra.mxu0 0.0
    %800 = vmatprep.subr.mxu0 0.0
    %801 = vmatpush1.msra.mxu0 0.0
    %802 = vmatprep.subr.mxu0 0.0
    %803 = vmatpush1.msra.mxu0 0.0
    %804 = vmatprep.subr.mxu0 0.0
    %805 = vmatpush1.msra.mxu0 0.0
    %806 = vmatprep.subr.mxu0 0.0
    %807 = vmatpush1.msra.mxu0 0.0
    %808 = vmatprep.subr.mxu0 0.0
    %809 = vmatpush1.msra.mxu0 0.0
    %810 = vmatprep.subr.mxu0 0.0
    %811 = vmatpush1.msra.mxu0 0.0
    %812 = vmatprep.subr.mxu0 0.0
    %813 = vmatpush1.msra.mxu0 0.0
    %814 = vmatprep.subr.mxu0 0.0
    %815 = vmatpush1.msra.mxu0 0.0
    %816 = vmatprep.subr.mxu0 0.0
    %817 = vmatpush1.msra.mxu0 0.0
    %818 = vmatprep.subr.mxu0 0.0
    %819 = vmatpush1.msra.mxu0 0.0
    %820 = vmatprep.subr.mxu0 0.0
    %821 = vmatpush1.msra.mxu0 0.0
    %822 = vmatprep.subr.mxu0 0.0
    %823 = vmatpush1.msra.mxu0 0.0
    %824 = vmatprep.subr.mxu0 0.0
    %825 = vmatpush1.msra.mxu0 0.0
    %826 = vmatprep.subr.mxu0 0.0
    %827 = vmatpush1.msra.mxu0 0.0
    %828 = vmatprep.subr.mxu0 0.0
    %829 = vmatpush1.msra.mxu0 0.0
    %830 = vmatprep.mubr.f32.mxu0 0.0
    %831 = vmatmul.mubr.f32.gmra.mrb[0].mxu0 %v130
    %v832 = vpop.f32.mrb[0].mxu0
    %v833 = vadd.f32 %v763, %v832
    %v834 = vpop.f32.mrb[0].mxu0
    %835 = vdwg.mxu0
    %836 = vst [vmem:[#allocation13] sm:$0xff] %v833
    // Predicated region
    $region58: #{tpu_custom_call.1} parent=1 // pred_check
      _
    $region59: #{tpu_custom_call.1} parent=1 // pred_check_branch
      %838 = sbr.rel (0) target = $region61
    $region60: #{tpu_custom_call.1} parent=1 // pred_region
      %s840 = ssub.s32 128, 128
      %841 = vsyncadd [#allocation4], %s840
      %s843 = sshll.u32 [#allocation13], 4
      %s844 = int_to_ptr.vmem [resolvable:$true] %s843
      %846 = dma.vmem_to_hbm [thread:$0]  %s844, 128, %s8, [#allocation4]
    $region61: #{tpu_custom_call.1} parent=1 // pred_fallthru
      _
    // Predicated region
    $region62: #{tpu_custom_call.1} parent=1 // pred_check
      _
    $region63: #{tpu_custom_call.1} parent=1 // pred_check_branch
      %848 = sbr.rel (0) target = $region65
    $region64: #{tpu_custom_call.1} parent=1 // pred_region
      %849 = dma.done [#allocation4], 128
    $region65: #{tpu_custom_call.1} parent=1 // pred_fallthru
      _
    %850 = vsyncpa [#allocation3], 1
    %851 = vsyncpa [#allocation6], 1
    %852 = vsyncpa [#allocation9], 1
    %853 = vsyncpa [#allocation12], 1
    %854 = vsyncpa [#allocation4], 1

</llo_original>
